<compile_context>
chip_gen: v6e
topology: v6e:2x2x1
jax: 0.10.0
libtpu: 0.0.40
codegen_flags: <defaults>
</compile_context>

<pallas_src>
import functools

import jax
import jax.numpy as jnp
from jax.experimental import pallas as pl
from jax.experimental.pallas import tpu as pltpu


def _round_up(x, m):
    return (x + m - 1) // m * m


def _leaky_relu(x, slope=0.01):
    return jnp.where(x > 0, x, slope * x)


# ---------------------------------------------------------------------------
# VMEM-capacity-aware tiling
# ---------------------------------------------------------------------------
def _vmem_budget_bytes():
    cap = 64 * 1024 * 1024
    try:
        info = pltpu.get_tpu_info()
        cap = int(getattr(info, "vmem_capacity_bytes", cap))
    except Exception:
        pass
    if cap >= 100 * 1024 * 1024:          # v5e / v6e: 128 MiB physical VMEM
        return 96 * 1024 * 1024
    return 48 * 1024 * 1024               # v7x: 64 MiB physical per TensorCore


def _pick_tiles(n, f, budget):
    """Choose (tm, tk) for the A-streaming passes within the VMEM budget."""
    tm = min(1024, _round_up(n, 8))        # row tile (sublane mult of 8)
    tk = min(4096, _round_up(n, 128))      # reduction tile (lane mult of 128)

    def vmem_need(tm_, tk_):
        n_pad_c = _round_up(n, tk_)
        a = 2 * tm_ * tk_ * 2              # double-buffered bf16 A tiles
        b = 2 * n_pad_c * f * 2            # resident bf16 B (double-buffer bound)
        out = 2 * tm_ * f * 2              # double-buffered bf16 out tiles
        acc = tm_ * f * 4                  # f32 accumulator scratch
        return a + b + out + acc

    while vmem_need(tm, tk) > budget and tk > 128:
        tk = max(128, _round_up(tk // 2, 128))
    while vmem_need(tm, tk) > budget and tm > 8:
        tm = max(8, _round_up(tm // 2, 8))

    # v7x has 2 TensorCores per chip: prefer >= 2 row tiles on larger graphs so
    # both cores get balanced work (no-op on 1-TC parts / small graphs).
    if _round_up(n, tm) // tm < 2 and tm >= 512:
        tm = _round_up(tm // 2, 8)
    return tm, tk


# ---------------------------------------------------------------------------
# Pallas kernel: one tiled pass of  leaky_relu(A_hat @ B + bias)
# ---------------------------------------------------------------------------
def _spmm_bias_leaky_kernel(a_ref, b_ref, bias_ref, o_ref, acc_ref, *,
                            tk, b_resident):
    k = pl.program_id(1)

    @pl.when(k == 0)
    def _():
        acc_ref[...] = jnp.zeros_like(acc_ref)

    if b_resident:
        # B is fully VMEM-resident: slice out the rows matching this k tile.
        start = pl.multiple_of(k * tk, tk)
        b_blk = b_ref[pl.ds(start, tk), :]
    else:
        b_blk = b_ref[...]

    # bf16 x bf16 MXU matmul with f32 accumulation.
    acc_ref[...] += jnp.dot(a_ref[...], b_blk,
                            preferred_element_type=jnp.float32)

    @pl.when(k == pl.num_programs(1) - 1)
    def _():
        h = acc_ref[...] + bias_ref[...]           # bias added once per row tile
        o_ref[...] = _leaky_relu(h).astype(o_ref.dtype)


def gcn_propagate(a_pad_bf16, b_pad_bf16, bias, *, tm, tk, vmem_limit):
    """leaky_relu(A_hat @ B + bias) over the zero-padded (n_pad_r, n_pad_c) A."""
    n_pad_r, n_pad_c = a_pad_bf16.shape
    f = b_pad_bf16.shape[1]
    grid = (n_pad_r // tm, n_pad_c // tk)

    # Keep B fully VMEM-resident when it fits (fetched once, no re-streaming
    # per row tile); otherwise fall back to streaming (tk, f) row blocks.
    b_resident = (2 * n_pad_c * f * 2) <= (vmem_limit // 4)
    if b_resident:
        b_spec = pl.BlockSpec((n_pad_c, f), lambda i, k: (0, 0))
    else:
        b_spec = pl.BlockSpec((tk, f), lambda i, k: (k, 0))

    kernel = functools.partial(_spmm_bias_leaky_kernel,
                               tk=tk, b_resident=b_resident)
    return pl.pallas_call(
        kernel,
        out_shape=jax.ShapeDtypeStruct((n_pad_r, f), jnp.bfloat16),
        grid_spec=pltpu.PrefetchScalarGridSpec(
            num_scalar_prefetch=0,
            grid=grid,
            in_specs=[
                pl.BlockSpec((tm, tk), lambda i, k: (i, k)),   # A tile (streamed)
                b_spec,                                         # B (resident or tiled)
                pl.BlockSpec((1, f), lambda i, k: (0, 0)),      # bias (resident)
            ],
            out_specs=pl.BlockSpec((tm, f), lambda i, k: (i, 0)),
            scratch_shapes=[pltpu.VMEM((tm, f), jnp.float32)],
        ),
        compiler_params=pltpu.CompilerParams(
            dimension_semantics=("parallel", "arbitrary"),
            vmem_limit_bytes=int(vmem_limit),
        ),
    )(a_pad_bf16, b_pad_bf16, bias)


# ---------------------------------------------------------------------------
# Graph glue (plain JAX): O(E) normalized adjacency build, PyG GCN semantics.
# ---------------------------------------------------------------------------
def build_normalized_adjacency_padded(edge_index, edge_weight, num_nodes,
                                      n_pad_r, n_pad_c):
    """bf16 D^{-1/2}(A + I)D^{-1/2} scattered once into a zero-padded buffer.

    A[dst, src] = edge_weight; degrees are the O(E) scatter of edge_weight over
    the dst index + 1 (self loop), matching PyG gcn_norm
    (flow='source_to_target').
    TODO(synk): PyG add_remaining_self_loops keeps an existing self-loop's
                weight rather than adding 1 on top; graphs with explicit
                self-loops in edge_index diverge slightly (kernel and the f32
                reference below use the same A + I convention).
    """
    src, dst = edge_index[0], edge_index[1]
    w = edge_weight.astype(jnp.float32)
    deg = jnp.zeros((num_nodes,), jnp.float32).at[dst].add(w) + 1.0
    dis = jax.lax.rsqrt(deg)                              # deg >= 1 always
    vals = (w * dis[dst] * dis[src]).astype(jnp.bfloat16)
    a = jnp.zeros((n_pad_r, n_pad_c), jnp.bfloat16)
    a = a.at[dst, src].add(vals)
    idx = jnp.arange(num_nodes)
    a = a.at[idx, idx].add((dis * dis).astype(jnp.bfloat16))   # self loops, w=1
    return a


def build_normalized_adjacency(edge_index, edge_weight, num_nodes):
    """f32 dense D^{-1/2}(A + I)D^{-1/2} (reference path only)."""
    src, dst = edge_index[0], edge_index[1]
    a = jnp.zeros((num_nodes, num_nodes), jnp.float32)
    a = a.at[dst, src].add(edge_weight.astype(jnp.float32))
    a = a + jnp.eye(num_nodes, dtype=jnp.float32)
    deg = jnp.sum(a, axis=1)
    dis = jnp.where(deg > 0, 1.0 / jnp.sqrt(deg), 0.0)
    return a * dis[:, None] * dis[None, :]


# ---------------------------------------------------------------------------
# Forward pass
# ---------------------------------------------------------------------------
def model_m_forward(x, edge_index, edge_weight, params, *, tm=None, tk=None):
    n = x.shape[0]
    budget = _vmem_budget_bytes()
    f_max = max(params["w1"].shape[1], params["w2"].shape[1])
    if tm is None or tk is None:
        auto_tm, auto_tk = _pick_tiles(n, f_max, budget)
        tm = auto_tm if tm is None else tm
        tk = auto_tk if tk is None else tk

    # Rows padded to a multiple of tm, reduction cols to a multiple of tk
    # (independent padding; padded rows/cols are zero so they never leak).
    n_pad_r = _round_up(n, tm)
    n_pad_c = _round_up(n, tk)

    # O(E) build straight into the padded bf16 buffer.  If the graph is static
    # across calls, hoist/cache this outside the forward.
    a_pad = build_normalized_adjacency_padded(edge_index, edge_weight, n,
                                              n_pad_r, n_pad_c)

    def pad_to_cols(m):
        return jnp.pad(m, ((0, n_pad_c - m.shape[0]), (0, 0))).astype(jnp.bfloat16)

    # conv1: leaky_relu(A_hat @ (X W1) + b1).  X@W1 is a tiny (N,8)x(8,32)
    # matmul -> compute once in XLA, stream A_hat in the Pallas kernel.
    xw1 = pad_to_cols(x.astype(jnp.float32) @ params["w1"])
    h1 = gcn_propagate(a_pad, xw1, params["b1"].reshape(1, -1),
                       tm=tm, tk=tk, vmem_limit=budget)
    # F.dropout(training=False) -> identity.
    # TODO(synk): GraphNorm (norm1/norm2) only runs when norm=True; the default
    #             norm=False forward path is what is implemented here.

    # conv2: leaky_relu(A_hat @ (H1 W2) + b2).
    h1w2 = pad_to_cols(h1[:n].astype(jnp.float32) @ params["w2"])
    h2 = gcn_propagate(a_pad, h1w2, params["b2"].reshape(1, -1),
                       tm=tm, tk=tk, vmem_limit=budget)

    # fc head (lane-width-1 output) kept out of the hot A-streaming kernels.
    return h2[:n].astype(jnp.float32) @ params["wf"] + params["bf"]


def model_m_reference(x, edge_index, edge_weight, params):
    """Pure-JAX f32 reference (for numeric sanity check)."""
    a = build_normalized_adjacency(edge_index, edge_weight, x.shape[0])
    h1 = _leaky_relu(a @ (x.astype(jnp.float32) @ params["w1"]) + params["b1"])
    h2 = _leaky_relu(a @ (h1 @ params["w2"]) + params["b2"])
    return h2 @ params["wf"] + params["bf"]


def init_params(node_features, key):
    k1, k2, k3 = jax.random.split(key, 3)

    def glorot(k, shape):
        fan_in, fan_out = shape
        lim = (6.0 / (fan_in + fan_out)) ** 0.5
        return jax.random.uniform(k, shape, jnp.float32, -lim, lim)

    return {
        "w1": glorot(k1, (node_features, 32)),
        "b1": jnp.zeros((32,), jnp.float32),
        "w2": glorot(k2, (32, 16)),
        "b2": jnp.zeros((16,), jnp.float32),
        "wf": glorot(k3, (16, 1)),
        "bf": jnp.zeros((1,), jnp.float32),
    }


if __name__ == "__main__":
    key = jax.random.PRNGKey(0)
    k_g1, k_g2, k_p = jax.random.split(key, 3)

    node_features = 8
    params = init_params(node_features, k_p)

    def make_graph(k, n, e):
        k_x, k_s, k_d, k_w = jax.random.split(k, 4)
        x = jax.random.normal(k_x, (n, node_features), jnp.float32)
        src = jax.random.randint(k_s, (e,), 0, n)
        dst = jax.random.randint(k_d, (e,), 0, n)
        edge_index = jnp.stack([src, dst], axis=0)                 # (2, E)
        edge_weight = jax.random.uniform(k_w, (e,), jnp.float32, 0.1, 1.0)
        return x, edge_index, edge_weight

    # Test 1: tiny graph, auto-picked tiles (single reduction step).
    x1, ei1, ew1 = make_graph(k_g1, 16, 32)
    out1 = jax.block_until_ready(model_m_forward(x1, ei1, ew1, params))
    assert out1.shape == (16, 1)
    ref1 = model_m_reference(x1, ei1, ew1, params)
    err1 = float(jnp.max(jnp.abs(out1 - ref1)))
    assert err1 < 5e-2, f"test1 max abs err vs f32 reference: {err1}"

    # Test 2: larger graph with forced small tiles so the k>0 accumulation path
    # and multiple row tiles (megacore sharding) are exercised.
    x2, ei2, ew2 = make_graph(k_g2, 200, 800)
    out2 = jax.block_until_ready(
        model_m_forward(x2, ei2, ew2, params, tm=64, tk=128))
    assert out2.shape == (200, 1)
    ref2 = model_m_reference(x2, ei2, ew2, params)
    err2 = float(jnp.max(jnp.abs(out2 - ref2)))
    assert err2 < 5e-2, f"test2 max abs err vs f32 reference: {err2}"

    print("KERNEL_OK")
</pallas_src>

<mosaic_0001>
module attributes {stable_mosaic.version = 11 : i64} {
  func.func @_spmm_bias_leaky_kernel(%arg0: i32, %arg1: i32, %arg2: memref<16x128xbf16, #tpu.memory_space<vmem>>, %arg3: memref<128x32xbf16, #tpu.memory_space<vmem>>, %arg4: memref<1x32xf32, #tpu.memory_space<vmem>>, %arg5: memref<16x32xbf16, #tpu.memory_space<vmem>>, %arg6: memref<16x32xf32, #tpu.memory_space<vmem>>) attributes {dimension_semantics = [#tpu.dimension_semantics<parallel>, #tpu.dimension_semantics<arbitrary>], iteration_bounds = array<i64: 1, 1>, scalar_prefetch = 0 : i64, scratch_operands = 1 : i64, tpu.core_type = #tpu.core_type<tc>, window_params = [{transform_indices = @transform_0, window_bounds = array<i64: 16, 128>}, {pipeline_mode = #tpu.pipeline_mode<synchronous>, transform_indices = @transform_1, window_bounds = array<i64: 128, 32>}, {pipeline_mode = #tpu.pipeline_mode<synchronous>, transform_indices = @transform_2, window_bounds = array<i64: 1, 32>}, {transform_indices = @transform_3, window_bounds = array<i64: 16, 32>}]} {
    %c0_i32 = arith.constant 0 : i32
    %0 = arith.cmpi eq, %arg1, %c0_i32 : i32
    %1 = arith.extui %0 : i1 to i32
    %c0_i32_0 = arith.constant 0 : i32
    %2 = arith.cmpi ne, %1, %c0_i32_0 : i32
    scf.if %2 {
      %cst_9 = arith.constant 0.000000e+00 : f32
      %15 = vector.broadcast %cst_9 : f32 to vector<16x32xf32>
      %c0_10 = arith.constant 0 : index
      %c0_11 = arith.constant 0 : index
      %16 = vector.load %arg6[%c0_10, %c0_11] : memref<16x32xf32, #tpu.memory_space<vmem>>, vector<16x32xf32>
      tpu.vector_store %arg6[%c0_10, %c0_11], %15 {strides = array<i32>} : memref<16x32xf32, #tpu.memory_space<vmem>>, vector<16x32xf32>,
    } else {
    }
    %c128_i32 = arith.constant 128 : i32
    %3 = arith.muli %arg1, %c128_i32 : i32
    %4 = tpu.assume_multiple %3, 128 : i32
    %5 = arith.index_cast %4 : i32 to index
    %c0 = arith.constant 0 : index
    %6 = vector.load %arg3[%5, %c0] : memref<128x32xbf16, #tpu.memory_space<vmem>>, vector<128x32xbf16>
    %c0_1 = arith.constant 0 : index
    %c0_2 = arith.constant 0 : index
    %7 = vector.load %arg6[%c0_1, %c0_2] : memref<16x32xf32, #tpu.memory_space<vmem>>, vector<16x32xf32>
    %c0_3 = arith.constant 0 : index
    %c0_4 = arith.constant 0 : index
    %8 = vector.load %arg2[%c0_3, %c0_4] : memref<16x128xbf16, #tpu.memory_space<vmem>>, vector<16x128xbf16>
    %cst = arith.constant dense<0.000000e+00> : vector<16x32xf32>
    %9 = tpu.matmul %8, %6, %cst {dimension_numbers = #tpu.dot_dimension_numbers<[1], [0], [0], [1], [0, 0, 1, 1], [], []>} : vector<16x128xbf16>, vector<128x32xbf16>, vector<16x32xf32> -> vector<16x32xf32>
    %10 = arith.addf %7, %9 : vector<16x32xf32>
    %c0_5 = arith.constant 0 : index
    %c0_6 = arith.constant 0 : index
    %11 = vector.load %arg6[%c0_5, %c0_6] : memref<16x32xf32, #tpu.memory_space<vmem>>, vector<16x32xf32>
    tpu.vector_store %arg6[%c0_5, %c0_6], %10 {strides = array<i32>} : memref<16x32xf32, #tpu.memory_space<vmem>>, vector<16x32xf32>,
    %c0_i32_7 = arith.constant 0 : i32
    %12 = arith.cmpi eq, %arg1, %c0_i32_7 : i32
    %13 = arith.extui %12 : i1 to i32
    %c0_i32_8 = arith.constant 0 : i32
    %14 = arith.cmpi ne, %13, %c0_i32_8 : i32
    scf.if %14 {
      %c0_9 = arith.constant 0 : index
      %c0_10 = arith.constant 0 : index
      %15 = vector.load %arg6[%c0_9, %c0_10] : memref<16x32xf32, #tpu.memory_space<vmem>>, vector<16x32xf32>
      %c0_11 = arith.constant 0 : index
      %c0_12 = arith.constant 0 : index
      %16 = vector.load %arg4[%c0_11, %c0_12] : memref<1x32xf32, #tpu.memory_space<vmem>>, vector<1x32xf32>
      %17 = vector.broadcast %16 : vector<1x32xf32> to vector<16x32xf32>
      %18 = arith.addf %15, %17 : vector<16x32xf32>
      %cst_13 = arith.constant 0.000000e+00 : f32
      %19 = vector.broadcast %cst_13 : f32 to vector<16x32xf32>
      %20 = arith.cmpf ogt, %18, %19 : vector<16x32xf32>
      %cst_14 = arith.constant 0.00999999977 : f32
      %21 = vector.broadcast %cst_14 : f32 to vector<16x32xf32>
      %22 = arith.mulf %21, %18 : vector<16x32xf32>
      %23 = arith.select %20, %18, %22 : vector<16x32xi1>, vector<16x32xf32>
      %24 = arith.truncf %23 : vector<16x32xf32> to vector<16x32xbf16>
      %c0_15 = arith.constant 0 : index
      %c0_16 = arith.constant 0 : index
      %25 = vector.load %arg5[%c0_15, %c0_16] : memref<16x32xbf16, #tpu.memory_space<vmem>>, vector<16x32xbf16>
      tpu.vector_store %arg5[%c0_15, %c0_16], %24 {strides = array<i32>} : memref<16x32xbf16, #tpu.memory_space<vmem>>, vector<16x32xbf16>,
    } else {
    }
    return
  }
  func.func @transform_0(%arg0: i32, %arg1: i32) -> (i32, i32) {
    %c0_i32 = arith.constant 0 : i32
    return %arg0, %arg1 : i32, i32
  }
  func.func @transform_1(%arg0: i32, %arg1: i32) -> (i32, i32) {
    %c0_i32 = arith.constant 0 : i32
    %c0_i32_0 = arith.constant 0 : i32
    %c0_i32_1 = arith.constant 0 : i32
    return %c0_i32, %c0_i32_0 : i32, i32
  }
  func.func @transform_2(%arg0: i32, %arg1: i32) -> (i32, i32) {
    %c0_i32 = arith.constant 0 : i32
    %c0_i32_0 = arith.constant 0 : i32
    %c0_i32_1 = arith.constant 0 : i32
    return %c0_i32, %c0_i32_0 : i32, i32
  }
  func.func @transform_3(%arg0: i32, %arg1: i32) -> (i32, i32) {
    %c0_i32 = arith.constant 0 : i32
    %c0_i32_0 = arith.constant 0 : i32
    return %arg0, %c0_i32 : i32, i32
  }
}

</mosaic_0001>

<llo_original>
// kernel: tpu_custom_call.1
$region0: #{tpu_custom_call.1}
  #allocation0 [shape = 'u32[]', space=smem, size = 0x4, offset = 0x4, fixed_abs, tag = 'smem constant byte address 0x4 - core index']
  #allocation1 [shape = 'u32[144,128]{1,0:T(1,128)}', space=vmem, size = 0x12000, scoped, tag = 'internal scratch']
  #allocation2 [shape = 'f32[16,32]{1,0:T(8,128)}', space=vmem, size = 0x2000, scoped, tag = 'scratch operand']
  %s0 = inlined_call_operand.vmem [shape: bf16[16,128], index: 0, kind: input, shape index: {}]
  %s1 = inlined_call_operand.vmem [shape: bf16[128,32], index: 1, kind: input, shape index: {}]
  %s2 = inlined_call_operand.vmem [shape: f32[1,32], index: 2, kind: input, shape index: {}]
  %s3 = inlined_call_operand.hbm [shape: bf16[16,32], index: 3, kind: output, shape index: {}]
  %s4 = sld [smem:[#allocation0]]
  $region30: #{tpu_custom_call.1} parent=0
    _
  %s6 = ssub.s32 1, %s4
  %s7 = scalar_select 0, %s6, %s4
  $region1: #{tpu_custom_call.1} parent=0
    #allocation3 [shape = 'u8[4096]{0}', space=vmem, size = 0x1000, scoped, tag = 'output window, operand 0, single buffered']
    #allocation4 [shape = 's32[1]{0}', space=sflag, size = 0x4, scoped, tag = 'scoped memory for tpu_custom_call.1']
    %8 = vsyncpa [#allocation4], 0
    // Predicated region
    $region2: #{tpu_custom_call.1} parent=1 // pred_check
      _
    $region3: #{tpu_custom_call.1} parent=1 // pred_check_branch
      %10 = sbr.rel (0) target = $region5
    $region4: #{tpu_custom_call.1} parent=1 // pred_region
      _
    $region5: #{tpu_custom_call.1} parent=1 // pred_fallthru
      _
    // Predicated region
    $region6: #{tpu_custom_call.1} parent=1 // pred_check
      _
    $region7: #{tpu_custom_call.1} parent=1 // pred_check_branch
      %12 = sbr.rel (0) target = $region9
    $region8: #{tpu_custom_call.1} parent=1 // pred_region
      _
    $region9: #{tpu_custom_call.1} parent=1 // pred_fallthru
      _
    // Predicated region
    $region10: #{tpu_custom_call.1} parent=1 // pred_check
      _
    $region11: #{tpu_custom_call.1} parent=1 // pred_check_branch
      %14 = sbr.rel (0) target = $region13
    $region12: #{tpu_custom_call.1} parent=1 // pred_region
      _
    $region13: #{tpu_custom_call.1} parent=1 // pred_fallthru
      _
    %p16 = scmp.eq.s32.totalorder 0, 0
    // Predicated region
    $region14: #{tpu_custom_call.1} parent=1 // pred_check
      %p17 = pneg %p16
    $region15: #{tpu_custom_call.1} parent=1 // pred_check_branch
      %19 = sbr.rel (%p17) target = $region17
    $region16: #{tpu_custom_call.1} parent=1 // pred_region
      %vm20 = vcmask 261120
      %21 = vst.msk [vmem:[#allocation2] sm:$0xff] %vm20, 0.0
      %22 = vst.msk [vmem:[#allocation2 + $0x8] sm:$0xff] %vm20, 0.0
    $region17: #{tpu_custom_call.1} parent=1 // pred_fallthru
      _
    %s23 = smul.u32 0, 128
    %s24 = sshra.s32 %s23, 3
    %s25 = sand.u32 %s23, 7
    %s26 = smul.addr %s24, 4
    %s27 = scalar_lea.vmem %s1, %s26
    %v28 = vld [vmem:[%s27] sm:$0xf]
    %v29 = vld [vmem:[%s27 + $0x4] sm:$0xf]
    %v30 = vld [vmem:[%s27 + $0x8] sm:$0xf]
    %v31 = vld [vmem:[%s27 + $0xc] sm:$0xf]
    %v32 = vld [vmem:[%s27 + $0x10] sm:$0xf]
    %v33 = vld [vmem:[%s27 + $0x14] sm:$0xf]
    %v34 = vld [vmem:[%s27 + $0x18] sm:$0xf]
    %v35 = vld [vmem:[%s27 + $0x1c] sm:$0xf]
    %v36 = vld [vmem:[%s27 + $0x20] sm:$0xf]
    %v37 = vld [vmem:[%s27 + $0x24] sm:$0xf]
    %v38 = vld [vmem:[%s27 + $0x28] sm:$0xf]
    %v39 = vld [vmem:[%s27 + $0x2c] sm:$0xf]
    %v40 = vld [vmem:[%s27 + $0x30] sm:$0xf]
    %v41 = vld [vmem:[%s27 + $0x34] sm:$0xf]
    %v42 = vld [vmem:[%s27 + $0x38] sm:$0xf]
    %v43 = vld [vmem:[%s27 + $0x3c] sm:$0xf]
    %v44 = vld [vmem:[#allocation2] sm:$0xff]
    %v45 = vld [vmem:[#allocation2 + $0x8] sm:$0xff]
    %v46 = vld [vmem:[%s0] sm:$0xf]
    %v47 = vld [vmem:[%s0 + $0x4] sm:$0xf]
    %v50 = vunpack.c.l.b16 %v46
    %v51 = vunpack.c.l.b16 %v47
    %v52 = vpack.c.b16 %v51, %v50
    %v70 = vunpack.c.l.b16 %v28
    %v71 = vunpack.c.l.b16 %v29
    %v72 = vunpack.c.l.b16 %v30
    %v73 = vunpack.c.l.b16 %v31
    %v74 = vunpack.c.l.b16 %v32
    %v75 = vunpack.c.l.b16 %v33
    %v76 = vunpack.c.l.b16 %v34
    %v77 = vunpack.c.l.b16 %v35
    %v78 = vunpack.c.l.b16 %v36
    %v79 = vunpack.c.l.b16 %v37
    %v80 = vunpack.c.l.b16 %v38
    %v81 = vunpack.c.l.b16 %v39
    %v82 = vunpack.c.l.b16 %v40
    %v83 = vunpack.c.l.b16 %v41
    %v84 = vunpack.c.l.b16 %v42
    %v85 = vunpack.c.l.b16 %v43
    %v86 = vpack.c.b16 %v71, %v70
    %v87 = vpack.c.b16 %v73, %v72
    %v88 = vpack.c.b16 %v75, %v74
    %v89 = vpack.c.b16 %v77, %v76
    %v90 = vpack.c.b16 %v79, %v78
    %v91 = vpack.c.b16 %v81, %v80
    %v92 = vpack.c.b16 %v83, %v82
    %v93 = vpack.c.b16 %v85, %v84
    %102 = vmatprep.subr.bf16.mxu0 0
    %103 = vmatpush1.bf16.msra.mxu0 %v93
    %104 = vmatprep.subr.bf16.mxu0 0
    %105 = vmatpush1.bf16.msra.mxu0 %v92
    %106 = vmatprep.subr.bf16.mxu0 0
    %107 = vmatpush1.bf16.msra.mxu0 %v91
    %108 = vmatprep.subr.bf16.mxu0 0
    %109 = vmatpush1.bf16.msra.mxu0 %v90
    %110 = vmatprep.subr.bf16.mxu0 0
    %111 = vmatpush1.bf16.msra.mxu0 %v89
    %112 = vmatprep.subr.bf16.mxu0 0
    %113 = vmatpush1.bf16.msra.mxu0 %v88
    %114 = vmatprep.subr.bf16.mxu0 0
    %115 = vmatpush1.bf16.msra.mxu0 %v87
    %116 = vmatprep.subr.bf16.mxu0 0
    %117 = vmatpush1.bf16.msra.mxu0 %v86
    %118 = vmatprep.subr.bf16.mxu0 0
    %119 = vmatpush2.bf16.msra.mxu0 0
    %120 = vmatprep.subr.bf16.mxu0 0
    %121 = vmatpush2.bf16.msra.mxu0 0
    %122 = vmatprep.subr.bf16.mxu0 0
    %123 = vmatpush2.bf16.msra.mxu0 0
    %124 = vmatprep.subr.bf16.mxu0 0
    %125 = vmatpush2.bf16.msra.mxu0 0
    %126 = vmatprep.subr.bf16.mxu0 0
    %127 = vmatpush2.bf16.msra.mxu0 0
    %128 = vmatprep.subr.bf16.mxu0 0
    %129 = vmatpush2.bf16.msra.mxu0 0
    %130 = vmatprep.subr.bf16.mxu0 0
    %131 = vmatpush2.bf16.msra.mxu0 0
    %132 = vmatprep.subr.bf16.mxu0 0
    %133 = vmatpush2.bf16.msra.mxu0 0
    %134 = vmatprep.mubr.bf16.mxu0 0
    %135 = vmatmul.mubr.bf16.gmra.mxu0 %v52
    %v136 = vpop.f32.mrf.mxu0
    %v137 = vadd.f32 0.0, %v136
    %v138 = vpop.f32.mrf.mxu0
    %v139 = vpop.f32.mrf.mxu0
    %v140 = vadd.f32 0.0, %v139
    %v141 = vpop.f32.mrf.mxu0
    %142 = vdwg.mxu0
    %v143 = vadd.f32 %v44, %v137
    %v144 = vadd.f32 %v45, %v140
    %vm145 = vcmask 261120
    %146 = vst.msk [vmem:[#allocation2] sm:$0xff] %vm145, %v143
    %147 = vst.msk [vmem:[#allocation2 + $0x8] sm:$0xff] %vm145, %v144
    // Predicated region
    $region18: #{tpu_custom_call.1} parent=1 // pred_check
      %p148 = pneg %p16
    $region19: #{tpu_custom_call.1} parent=1 // pred_check_branch
      %150 = sbr.rel (%p148) target = $region21
    $region20: #{tpu_custom_call.1} parent=1 // pred_region
      %v151 = vld [vmem:[#allocation2] sm:$0xff]
      %v152 = vld [vmem:[#allocation2 + $0x8] sm:$0xff]
      %v153 = vld [vmem:[%s2] sm:$0x1]
      %v155 = vlaneseq
      %v156 = vshrl.u32 %v155, 7
      %v157 = vsub.s32 0, %v156
      %v158 = vrot.slane %v153, %v157
      %v160 = vadd.f32 %v151, %v158
      %v161 = vadd.f32 %v152, %v158
      %vm162 = vcmp.gt.f32.partialorder %v160, 0.0
      %vm163 = vcmp.gt.f32.partialorder %v161, 0.0
      %v164 = vmul.f32 %v160, 0.01
      %v165 = vmul.f32 %v161, 0.01
      %v166 = vsel %vm162, %v160, %v164
      %v167 = vsel %vm163, %v161, %v165
      %v168 = vpack.c.bf16 %v167, %v166
      %v170 = vunpack.c.l.b16 %v168
      %v171 = vunpack.c.h.b16 %v168
      %v172 = vpack.c.b16 %v170, %v170
      %v173 = vpack.c.b16 %v171, %v171
      %vm176 = vcmask 257024
      %177 = vst.msk [vmem:[#allocation3] sm:$0xf] %vm176, %v172
      %178 = vst.msk [vmem:[#allocation3 + $0x4] sm:$0xf] %vm176, %v173
    $region21: #{tpu_custom_call.1} parent=1 // pred_fallthru
      _
    // Predicated region
    $region22: #{tpu_custom_call.1} parent=1 // pred_check
      _
    $region23: #{tpu_custom_call.1} parent=1 // pred_check_branch
      %180 = sbr.rel (0) target = $region25
    $region24: #{tpu_custom_call.1} parent=1 // pred_region
      %s182 = ssub.s32 128, 128
      %183 = vsyncadd [#allocation4], %s182
      %s184 = sshll.u32 [#allocation3], 4
      %s185 = int_to_ptr.vmem [resolvable:$true] %s184
      %190 = dma.vmem_to_hbm [thread:$0]  %s185, 128, %s3, [#allocation4], 64, 64, 4
    $region25: #{tpu_custom_call.1} parent=1 // pred_fallthru
      _
    // Predicated region
    $region26: #{tpu_custom_call.1} parent=1 // pred_check
      _
    $region27: #{tpu_custom_call.1} parent=1 // pred_check_branch
      %192 = sbr.rel (0) target = $region29
    $region28: #{tpu_custom_call.1} parent=1 // pred_region
      %193 = dma.done [#allocation4], 128
    $region29: #{tpu_custom_call.1} parent=1 // pred_fallthru
      _
    %194 = vsyncpa [#allocation4], 1

</llo_original>
